<compile_context>
chip_gen: v7x
topology: tpu7x:2x2x1
jax: 0.10.0
libtpu: 0.0.40
codegen_flags: <defaults>
</compile_context>

<pallas_src>
import functools

import jax
import jax.numpy as jnp
from jax.experimental import pallas as pl
from jax.experimental.pallas import tpu as pltpu

_EPS = 1e-8
_LANES = 128
_SUBLANES = 8
_CHUNK_ROWS = 512                        # rows per inner compute chunk
_BYTES_PER_INPUT_BUF = 4 * 1024 * 1024   # per-input, per-pipeline-buffer budget
_VMEM_LIMIT_BYTES = 32 * 1024 * 1024     # 2 inputs x 2 buffers x 4 MiB + slack


def _round_up(x, m):
    return -(-x // m) * m


def _mape_partial_kernel(p_ref, a_ref, o_ref, *,
                         tile_rows, chunk_rows, valid_rows, need_mask):
    """Fold |(p - a) / (a + eps)| over this step's (tile_rows, 128) block into
    an (8, 128) f32 partial sum written to this grid step's own output slot."""
    num_chunks = tile_rows // chunk_rows

    def block_sum(masked):
        def body(c, acc):
            r0 = pl.multiple_of(c * chunk_rows, chunk_rows)
            p = p_ref[pl.ds(r0, chunk_rows), :].astype(jnp.float32)
            a = a_ref[pl.ds(r0, chunk_rows), :].astype(jnp.float32)
            ape = jnp.abs((p - a) * pl.reciprocal(a + jnp.float32(_EPS)))
            if masked:
                # The last grid block may extend past the array; those rows
                # read unspecified data, so SELECT them to zero (never a
                # multiply-by-mask: garbage rows may hold inf/NaN).
                g_row = (pl.program_id(0) * tile_rows + r0
                         + jax.lax.broadcasted_iota(jnp.int32, ape.shape, 0))
                ape = jnp.where(g_row < valid_rows, ape, jnp.float32(0.0))
            # (chunk, 128) -> (chunk//8, 8, 128) -> (8, 128): tile-aligned
            # reshape, VALU-only adds.
            folded = jnp.sum(
                ape.reshape(chunk_rows // _SUBLANES, _SUBLANES, _LANES), axis=0)
            return acc + folded

        init = jnp.zeros((_SUBLANES, _LANES), jnp.float32)
        return jax.lax.fori_loop(0, num_chunks, body, init,
                                 unroll=(num_chunks <= 8))

    if not need_mask:
        o_ref[...] = block_sum(False)
    else:
        is_last = pl.program_id(0) == pl.num_programs(0) - 1

        @pl.when(jnp.logical_not(is_last))
        def _():
            o_ref[...] = block_sum(False)

        @pl.when(is_last)
        def _():
            o_ref[...] = block_sum(True)


def mape(preds, answer):
    """MAPE(preds, answer) -> scalar float32, matching the PyTorch module."""
    assert preds.shape == answer.shape
    n = preds.size
    if n == 0:
        return jnp.float32(jnp.nan)

    # Flatten in the original dtype (no upcast copy in HBM).
    p_flat = preds.reshape(-1)
    a_flat = answer.reshape(-1)

    # Pad only when n is not a multiple of one lane row (<= 127 zeros, which
    # contribute |0/(0+eps)| = 0).  Every 128-aligned size is pad-free; the
    # ragged row remainder is masked in-kernel on the last grid step instead.
    if n % _LANES != 0:
        pad = _LANES - (n % _LANES)
        p_flat = jnp.pad(p_flat, (0, pad))
        a_flat = jnp.pad(a_flat, (0, pad))

    rows = p_flat.shape[0] // _LANES
    p2 = p_flat.reshape(rows, _LANES)
    a2 = a_flat.reshape(rows, _LANES)

    # dtype-aware sublane packing: f32 -> 8 rows/vreg, bf16 -> 16, int8 -> 32.
    itemsizes = [jnp.dtype(p2.dtype).itemsize, jnp.dtype(a2.dtype).itemsize]
    pack = _SUBLANES * max(1, 4 // min(itemsizes))
    max_itemsize = max(itemsizes)

    # Inner chunk: multiple of the sublane pack, capped at _CHUNK_ROWS.
    chunk_rows = min(_CHUNK_ROWS, _round_up(rows, pack))

    # Tile rows from the byte budget (bf16 automatically gets 2x the rows),
    # floored to a multiple of chunk_rows.
    rows_budget = max(
        chunk_rows,
        (_BYTES_PER_INPUT_BUF // (_LANES * max_itemsize))
        // chunk_rows * chunk_rows,
    )
    tile_rows = min(rows_budget, _round_up(rows, chunk_rows))
    num_steps = pl.cdiv(rows, tile_rows)
    # Prefer >= 2 grid steps when there is enough work so the "parallel"
    # grid axis can be sharded across both TensorCores on v7x.
    if num_steps == 1 and tile_rows > chunk_rows:
        tile_rows = _round_up(pl.cdiv(rows, 2), chunk_rows)
        num_steps = pl.cdiv(rows, tile_rows)

    need_mask = (rows % tile_rows) != 0  # ragged last block only

    kernel = functools.partial(
        _mape_partial_kernel,
        tile_rows=tile_rows,
        chunk_rows=chunk_rows,
        valid_rows=rows,
        need_mask=need_mask,
    )

    partials = pl.pallas_call(
        kernel,
        out_shape=jax.ShapeDtypeStruct((num_steps * _SUBLANES, _LANES),
                                       jnp.float32),
        grid=(num_steps,),
        in_specs=[
            pl.BlockSpec((tile_rows, _LANES), lambda i: (i, 0)),
            pl.BlockSpec((tile_rows, _LANES), lambda i: (i, 0)),
        ],
        out_specs=pl.BlockSpec((_SUBLANES, _LANES), lambda i: (i, 0)),
        compiler_params=pltpu.CompilerParams(
            dimension_semantics=("parallel",),
            vmem_limit_bytes=_VMEM_LIMIT_BYTES,
        ),
    )(p2, a2)

    # Final tiny reduction + scale by 100 / (original, unpadded) element count.
    return jnp.sum(partials) * jnp.float32(100.0 / n)


if __name__ == "__main__":
    key = jax.random.PRNGKey(0)
    k1, k2 = jax.random.split(key)
    # Small shape consistent with a generic loss over NCHW activations.
    shape = (2, 4, 16, 16)
    preds = jax.random.normal(k1, shape, dtype=jnp.float32)
    # Keep answers away from zero so the reference value is well-conditioned.
    answer = jax.random.normal(k2, shape, dtype=jnp.float32) + 3.0

    result = jax.block_until_ready(mape(preds, answer))

    # Pure-JAX reference check.
    ref = jnp.mean(jnp.abs((preds - answer) / (answer + 1e-8))) * 100.0
    assert jnp.allclose(result, ref, rtol=1e-5, atol=1e-4), (result, ref)

    print("KERNEL_OK")
</pallas_src>

<mosaic_0001>
module attributes {stable_mosaic.version = 11 : i64} {
  func.func @_mape_partial_kernel(%arg0: i32, %arg1: memref<16x128xf32, #tpu.memory_space<vmem>>, %arg2: memref<16x128xf32, #tpu.memory_space<vmem>>, %arg3: memref<8x128xf32, #tpu.memory_space<vmem>>) attributes {dimension_semantics = [#tpu.dimension_semantics<parallel>], iteration_bounds = array<i64: 1>, scalar_prefetch = 0 : i64, scratch_operands = 0 : i64, tpu.core_type = #tpu.core_type<tc>, window_params = [{transform_indices = @transform_0, window_bounds = array<i64: 16, 128>}, {transform_indices = @transform_1, window_bounds = array<i64: 16, 128>}, {transform_indices = @transform_2, window_bounds = array<i64: 8, 128>}]} {
    %cst = arith.constant 0.000000e+00 : f32
    %0 = vector.broadcast %cst : f32 to vector<8x128xf32>
    %c0_i32 = arith.constant 0 : i32
    %c16_i32 = arith.constant 16 : i32
    %1 = arith.muli %c0_i32, %c16_i32 : i32
    %2 = tpu.assume_multiple %1, 16 : i32
    %3 = arith.index_cast %2 : i32 to index
    %c0 = arith.constant 0 : index
    %4 = vector.load %arg1[%3, %c0] : memref<16x128xf32, #tpu.memory_space<vmem>>, vector<16x128xf32>
    %5 = arith.index_cast %2 : i32 to index
    %c0_0 = arith.constant 0 : index
    %6 = vector.load %arg2[%5, %c0_0] : memref<16x128xf32, #tpu.memory_space<vmem>>, vector<16x128xf32>
    %7 = arith.subf %4, %6 : vector<16x128xf32>
    %cst_1 = arith.constant 9.99999993E-9 : f32
    %8 = vector.broadcast %cst_1 : f32 to vector<16x128xf32>
    %9 = arith.addf %6, %8 : vector<16x128xf32>
    %10 = tpu.reciprocal %9 : vector<16x128xf32> -> vector<16x128xf32>
    %11 = arith.mulf %7, %10 : vector<16x128xf32>
    %12 = math.absf %11 : vector<16x128xf32>
    %13 = vector.shape_cast %12 : vector<16x128xf32> to vector<2x8x128xf32>
    %cst_2 = arith.constant dense<0.000000e+00> : vector<8x128xf32>
    %14 = vector.multi_reduction <add>, %13, %cst_2 [0] : vector<2x8x128xf32> to vector<8x128xf32>
    %15 = arith.addf %0, %14 : vector<8x128xf32>
    %c1_i32 = arith.constant 1 : i32
    %c0_3 = arith.constant 0 : index
    %c0_4 = arith.constant 0 : index
    %16 = vector.load %arg3[%c0_3, %c0_4] : memref<8x128xf32, #tpu.memory_space<vmem>>, vector<8x128xf32>
    tpu.vector_store %arg3[%c0_3, %c0_4], %15 {strides = array<i32>} : memref<8x128xf32, #tpu.memory_space<vmem>>, vector<8x128xf32>,
    return
  }
  func.func @transform_0(%arg0: i32) -> (i32, i32) {
    %c0_i32 = arith.constant 0 : i32
    %c0_i32_0 = arith.constant 0 : i32
    return %arg0, %c0_i32 : i32, i32
  }
  func.func @transform_1(%arg0: i32) -> (i32, i32) {
    %c0_i32 = arith.constant 0 : i32
    %c0_i32_0 = arith.constant 0 : i32
    return %arg0, %c0_i32 : i32, i32
  }
  func.func @transform_2(%arg0: i32) -> (i32, i32) {
    %c0_i32 = arith.constant 0 : i32
    %c0_i32_0 = arith.constant 0 : i32
    return %arg0, %c0_i32 : i32, i32
  }
}

</mosaic_0001>

<llo_original>
// kernel: tpu_custom_call.1
$region0: #{tpu_custom_call.1}
  #allocation0 [shape = 'u32[]', space=smem, size = 0x4, offset = 0x4, fixed_abs, tag = 'smem constant byte address 0x4 - core index']
  #allocation1 [shape = 'u32[144,128]{1,0:T(1,128)}', space=vmem, size = 0x12000, scoped, tag = 'internal scratch']
  %s0 = inlined_call_operand.hbm [shape: f32[16,128], index: 0, kind: input, shape index: {}]
  %s1 = inlined_call_operand.hbm [shape: f32[16,128], index: 1, kind: input, shape index: {}]
  %s2 = inlined_call_operand.hbm [shape: f32[8,128], index: 2, kind: output, shape index: {}]
  %s3 = sld [smem:[#allocation0]]
  $region26: #{tpu_custom_call.1} parent=0
    _
  %s5 = ssub.s32 1, %s3
  %s6 = scalar_select 0, %s5, %s3
  $region1: #{tpu_custom_call.1} parent=0
    #allocation2 [shape = 'u8[8192]{0}', space=vmem, size = 0x2000, scoped, tag = 'input window, operand 0, single buffered']
    #allocation3 [shape = 's32[1]{0}', space=sflag, size = 0x4, scoped, tag = 'scoped memory for tpu_custom_call.1']
    #allocation4 [shape = 's32[1]{0}', space=sflag, size = 0x4, scoped, tag = 'scoped memory for tpu_custom_call.1']
    #allocation5 [shape = 'u8[8192]{0}', space=vmem, size = 0x2000, scoped, tag = 'input window, operand 1, single buffered']
    #allocation6 [shape = 's32[1]{0}', space=sflag, size = 0x4, scoped, tag = 'scoped memory for tpu_custom_call.1']
    #allocation7 [shape = 'u8[4096]{0}', space=vmem, size = 0x1000, scoped, tag = 'output window, operand 0, single buffered']
    %7 = vsyncpa [#allocation3], 0
    %8 = vsyncpa [#allocation6], 0
    %9 = vsyncpa [#allocation4], 0
    // Predicated region
    $region2: #{tpu_custom_call.1} parent=1 // pred_check
      _
    $region3: #{tpu_custom_call.1} parent=1 // pred_check_branch
      %11 = sbr.rel (0) target = $region5
    $region4: #{tpu_custom_call.1} parent=1 // pred_region
      %s13 = ssub.s32 256, 256
      %14 = vsyncadd [#allocation3], %s13
      %s15 = sshll.u32 [#allocation2], 4
      %s16 = int_to_ptr.vmem [resolvable:$true] %s15
      %21 = dma.hbm_to_vmem [thread:$0]  %s0, 256, %s16, [#allocation3], 128, 128, 8
    $region5: #{tpu_custom_call.1} parent=1 // pred_fallthru
      _
    // Predicated region
    $region6: #{tpu_custom_call.1} parent=1 // pred_check
      _
    $region7: #{tpu_custom_call.1} parent=1 // pred_check_branch
      %23 = sbr.rel (0) target = $region9
    $region8: #{tpu_custom_call.1} parent=1 // pred_region
      %s25 = ssub.s32 256, 256
      %26 = vsyncadd [#allocation6], %s25
      %s27 = sshll.u32 [#allocation5], 4
      %s28 = int_to_ptr.vmem [resolvable:$true] %s27
      %33 = dma.hbm_to_vmem [thread:$0]  %s1, 256, %s28, [#allocation6], 128, 128, 8
    $region9: #{tpu_custom_call.1} parent=1 // pred_fallthru
      _
    // Predicated region
    $region10: #{tpu_custom_call.1} parent=1 // pred_check
      _
    $region11: #{tpu_custom_call.1} parent=1 // pred_check_branch
      %35 = sbr.rel (0) target = $region13
    $region12: #{tpu_custom_call.1} parent=1 // pred_region
      %36 = dma.done [#allocation3], 256
    $region13: #{tpu_custom_call.1} parent=1 // pred_fallthru
      _
    // Predicated region
    $region14: #{tpu_custom_call.1} parent=1 // pred_check
      _
    $region15: #{tpu_custom_call.1} parent=1 // pred_check_branch
      %38 = sbr.rel (0) target = $region17
    $region16: #{tpu_custom_call.1} parent=1 // pred_region
      %39 = dma.done [#allocation6], 256
    $region17: #{tpu_custom_call.1} parent=1 // pred_fallthru
      _
    %v40 = vld [vmem:[#allocation2] sm:$0xff]
    %v41 = vld [vmem:[#allocation2 + $0x8] sm:$0xff]
    %v42 = vld [vmem:[#allocation5] sm:$0xff]
    %v43 = vld [vmem:[#allocation5 + $0x8] sm:$0xff]
    %v44 = vsub.f32 %v40, %v42
    %v45 = vsub.f32 %v41, %v43
    %v46 = vadd.f32 %v42, 1e-08
    %v47 = vadd.f32 %v43, 1e-08
    %v48 = vrcp.pop %v46
    %v49 = vrcp.pop %v47
    %v50 = vmul.f32 %v44, %v48
    %v51 = vmul.f32 %v45, %v49
    %v52 = vand.u32 2147483647, %v50
    %v53 = vand.u32 2147483647, %v51
    %v54 = vadd.f32 %v52, %v53
    %v55 = vadd.f32 %v54, 0.0
    %56 = vst [vmem:[#allocation7] sm:$0xff] %v55
    // Predicated region
    $region18: #{tpu_custom_call.1} parent=1 // pred_check
      _
    $region19: #{tpu_custom_call.1} parent=1 // pred_check_branch
      %58 = sbr.rel (0) target = $region21
    $region20: #{tpu_custom_call.1} parent=1 // pred_region
      %s60 = ssub.s32 128, 128
      %61 = vsyncadd [#allocation4], %s60
      %s63 = sshll.u32 [#allocation7], 4
      %s64 = int_to_ptr.vmem [resolvable:$true] %s63
      %66 = dma.vmem_to_hbm [thread:$0]  %s64, 128, %s2, [#allocation4]
    $region21: #{tpu_custom_call.1} parent=1 // pred_fallthru
      _
    // Predicated region
    $region22: #{tpu_custom_call.1} parent=1 // pred_check
      _
    $region23: #{tpu_custom_call.1} parent=1 // pred_check_branch
      %68 = sbr.rel (0) target = $region25
    $region24: #{tpu_custom_call.1} parent=1 // pred_region
      %69 = dma.done [#allocation4], 128
    $region25: #{tpu_custom_call.1} parent=1 // pred_fallthru
      _
    %70 = vsyncpa [#allocation3], 1
    %71 = vsyncpa [#allocation6], 1
    %72 = vsyncpa [#allocation4], 1

</llo_original>
